<compile_context>
chip_gen: v7x
topology: tpu7x:2x2x1
jax: 0.10.0
libtpu: 0.0.40
codegen_flags: <defaults>
</compile_context>

<pallas_src>
import functools

import jax
import jax.numpy as jnp
import numpy as np
from jax.experimental import pallas as pl
from jax.experimental.pallas import tpu as pltpu


def _dsc_kernel(x_ref, dww_ref, dwb_ref, pww_ref, pwb_ref, o_ref, *,
                H, W, cin, cout, nb):
    """Processes `nb` images per grid step.

    x_ref  : (nb*cin, HW)  input slab: image/channel rows on sublanes, pixels on lanes
    dww_ref: (nb*cin, 9)   depthwise 3x3 weights (tiled per image), col = ki*3 + kj
    dwb_ref: (nb*cin, 1)   depthwise bias (tiled per image)
    pww_ref: (cout, cin)   pointwise 1x1 weights
    pwb_ref: (cout, 1)     pointwise bias
    o_ref  : (nb*cout, HW) output slab (lane-dense, unmasked stores)
    """
    HW = H * W
    f32 = jnp.float32

    x = x_ref[...].astype(f32)       # (nb*cin, HW)
    dww = dww_ref[...]
    dwb = dwb_ref[...]
    pww = pww_ref[...]
    pwb = pwb_ref[...]

    # ---- edge-validity masks for the zero-padded 3x3 halo, built once at (1, HW) ----
    pidx = jax.lax.broadcasted_iota(jnp.int32, (1, HW), 1)
    col = (pidx & (W - 1)) if (W & (W - 1)) == 0 else (pidx % W)
    row_ok_up = pidx >= W                  # input row h-1 exists
    row_ok_dn = pidx < (H - 1) * W         # input row h+1 exists
    col_ok_l = col >= 1                    # input col w-1 exists
    col_ok_r = col < (W - 1)               # input col w+1 exists

    zero = jnp.zeros((), f32)

    # ---- depthwise 3x3 (stride 1, pad 1), factored: 4 rolls + 4 selects total ----
    # Column-neighbor values shared by all three kernel rows (XLU rolls, cheap).
    x_l = jnp.where(col_ok_l, pltpu.roll(x, shift=1, axis=1), zero)        # x[h, w-1]
    x_r = jnp.where(col_ok_r, pltpu.roll(x, shift=HW - 1, axis=1), zero)   # x[h, w+1]

    def hsum(ki):   # weighted sum over kernel row ki: per-channel lane-broadcast FMAs
        return (dww[:, 3 * ki + 0:3 * ki + 1] * x_l
                + dww[:, 3 * ki + 1:3 * ki + 2] * x
                + dww[:, 3 * ki + 2:3 * ki + 3] * x_r)

    acc = dwb + hsum(1)                                                               # di = 0
    acc = acc + jnp.where(row_ok_up, pltpu.roll(hsum(0), shift=W, axis=1), zero)      # di = -1
    acc = acc + jnp.where(row_ok_dn, pltpu.roll(hsum(2), shift=HW - W, axis=1), zero)  # di = +1

    # ---- pointwise 1x1 (VPU broadcast-FMAs; MXU would be idle at 4->8 channels),
    #      InstanceNorm2d (affine=False, eps=1e-5, biased var over H*W per (n, c)),
    #      LeakyReLU(0.2).  Per image, so output stores are (cout, HW) lane-dense. ----
    inv_hw = f32(1.0 / HW)
    pwb_b = jnp.broadcast_to(pwb, (cout, HW))     # hoisted (broadcasts are not CSE'd)
    # Static unroll over the (small, capped) per-block image count.
    # TODO(synk): for production-sized nb (hundreds of images / large feature maps),
    # stage `acc` in a VMEM scratch and use lax.fori_loop(..., unroll=True) here to
    # bound vreg live ranges; an H-tiled grid axis would also need a 1-row halo.
    for n in range(nb):
        base = n * cin
        y = pwb_b
        for ci in range(cin):
            y = y + pww[:, ci:ci + 1] * acc[base + ci:base + ci + 1, :]
        mean = jnp.sum(y, axis=1, keepdims=True) * inv_hw
        cen = y - mean
        var = jnp.sum(cen * cen, axis=1, keepdims=True) * inv_hw
        yn = cen * jax.lax.rsqrt(var + 1e-5)
        out = jnp.maximum(yn, 0.2 * yn)           # LeakyReLU(0.2) without compare+select
        o_ref[n * cout:(n + 1) * cout, :] = out.astype(o_ref.dtype)


def _pick_images_per_block(N, Cin, Cout, HW, itemsize=4):
    """Largest divisor of N such that one (in+out) block stays around <= ~2 MiB
    (double-buffered pipeline thus far below v7x's 32 MiB default scoped VMEM and
    128 MiB on v5e/v6e), the Python unroll stays small, and the sublane dims of the
    block are 8-aligned (or cover the full array)."""
    per_img = (Cin + Cout) * HW * itemsize
    budget = 2 << 20
    for d in range(min(N, 32), 0, -1):
        if N % d != 0 or d * per_img > budget:
            continue
        if d == N or ((d * Cin) % 8 == 0 and (d * Cout) % 8 == 0):
            return d
    # Fallback: whole batch in one block (always satisfies the (8,128) rule).
    return N


def dsc_forward(x_nchw, dw_w, dw_b, pw_w, pw_b):
    """DSC forward.  x_nchw: (N, Cin, H, W) f32 -> (N, Cout, H, W) f32.

    dw_w: (Cin, 9)    = torch depthwise weight (Cin, 1, 3, 3).reshape(Cin, 9)
    dw_b: (Cin,)
    pw_w: (Cout, Cin) = torch pointwise weight (Cout, Cin, 1, 1)[:, :, 0, 0]
    pw_b: (Cout,)
    """
    N, Cin, H, W = x_nchw.shape
    Cout = pw_w.shape[0]
    HW = H * W

    nb = _pick_images_per_block(N, Cin, Cout, HW)
    assert N % nb == 0

    # NCHW stays put; metadata-only reshapes (no extra HBM round trips).
    x_flat = x_nchw.astype(jnp.float32).reshape(N * Cin, HW)
    dww = jnp.tile(dw_w.astype(jnp.float32), (nb, 1))                   # (nb*Cin, 9)
    dwb = jnp.tile(dw_b.astype(jnp.float32).reshape(Cin, 1), (nb, 1))   # (nb*Cin, 1)
    pww = pw_w.astype(jnp.float32)                                      # (Cout, Cin)
    pwb = pw_b.astype(jnp.float32).reshape(Cout, 1)                     # (Cout, 1)

    out_flat = pl.pallas_call(
        functools.partial(_dsc_kernel, H=H, W=W, cin=Cin, cout=Cout, nb=nb),
        out_shape=jax.ShapeDtypeStruct((N * Cout, HW), jnp.float32),
        grid=(N // nb,),
        in_specs=[
            pl.BlockSpec((nb * Cin, HW), lambda b: (b, 0)),   # nb images' channels per step
            pl.BlockSpec((nb * Cin, 9), lambda b: (0, 0)),
            pl.BlockSpec((nb * Cin, 1), lambda b: (0, 0)),
            pl.BlockSpec((Cout, Cin), lambda b: (0, 0)),
            pl.BlockSpec((Cout, 1), lambda b: (0, 0)),
        ],
        out_specs=pl.BlockSpec((nb * Cout, HW), lambda b: (b, 0)),
        compiler_params=pltpu.CompilerParams(
            # image-block axis is independent -> shards across 2 TensorCores on v7x
            dimension_semantics=("parallel",)),
    )(x_flat, dww, dwb, pww, pwb)

    return out_flat.reshape(N, Cout, H, W)   # metadata-only reshape (no copy)


def dsc_reference(x_nchw, dw_w, dw_b, pw_w, pw_b):
    """Pure-JAX reference implementing the same math (for self-check)."""
    N, Cin, H, W = x_nchw.shape
    xp = jnp.pad(x_nchw, ((0, 0), (0, 0), (1, 1), (1, 1)))
    acc = jnp.zeros((N, Cin, H, W), jnp.float32)
    for ki in range(3):
        for kj in range(3):
            w = dw_w[:, ki * 3 + kj][None, :, None, None]
            acc = acc + xp[:, :, ki:ki + H, kj:kj + W] * w
    acc = acc + dw_b[None, :, None, None]
    y = jnp.einsum('nchw,dc->ndhw', acc, pw_w) + pw_b[None, :, None, None]
    mean = jnp.mean(y, axis=(2, 3), keepdims=True)
    var = jnp.mean((y - mean) ** 2, axis=(2, 3), keepdims=True)
    yn = (y - mean) * jax.lax.rsqrt(var + 1e-5)
    return jnp.where(yn >= 0, yn, 0.2 * yn)


if __name__ == "__main__":
    # Small shapes consistent with the module's forward.
    N, Cin, Cout, H, W = 2, 4, 8, 16, 16

    key = jax.random.PRNGKey(0)
    k_x, k_dw, k_dwb, k_pw, k_pwb = jax.random.split(key, 5)

    x = jax.random.normal(k_x, (N, Cin, H, W), jnp.float32)

    # Deterministic synthetic parameters (shapes map 1:1 onto the PyTorch layers):
    #   depthwise Conv2d weight (Cin,1,3,3) -> stored as (Cin, 9), col = ki*3+kj
    #   pointwise Conv2d weight (Cout,Cin,1,1) -> stored as (Cout, Cin)
    dw_w = 0.3 * jax.random.normal(k_dw, (Cin, 9), jnp.float32)
    dw_b = 0.1 * jax.random.normal(k_dwb, (Cin,), jnp.float32)
    pw_w = 0.3 * jax.random.normal(k_pw, (Cout, Cin), jnp.float32)
    pw_b = 0.1 * jax.random.normal(k_pwb, (Cout,), jnp.float32)

    out = jax.block_until_ready(dsc_forward(x, dw_w, dw_b, pw_w, pw_b))
    ref = jax.block_until_ready(dsc_reference(x, dw_w, dw_b, pw_w, pw_b))
    np.testing.assert_allclose(np.asarray(out), np.asarray(ref),
                               rtol=1e-4, atol=1e-4)

    assert out.shape == (N, Cout, H, W)
    print("KERNEL_OK")
</pallas_src>

<mosaic_0001>
module attributes {stable_mosaic.version = 11 : i64} {
  func.func @_dsc_kernel(%arg0: i32, %arg1: memref<8x256xf32, #tpu.memory_space<vmem>>, %arg2: memref<8x9xf32, #tpu.memory_space<vmem>>, %arg3: memref<8x1xf32, #tpu.memory_space<vmem>>, %arg4: memref<8x4xf32, #tpu.memory_space<vmem>>, %arg5: memref<8x1xf32, #tpu.memory_space<vmem>>, %arg6: memref<16x256xf32, #tpu.memory_space<vmem>>) attributes {dimension_semantics = [#tpu.dimension_semantics<parallel>], iteration_bounds = array<i64: 1>, scalar_prefetch = 0 : i64, scratch_operands = 0 : i64, tpu.core_type = #tpu.core_type<tc>, window_params = [{transform_indices = @transform_0, window_bounds = array<i64: 8, 256>}, {pipeline_mode = #tpu.pipeline_mode<synchronous>, transform_indices = @transform_1, window_bounds = array<i64: 8, 9>}, {pipeline_mode = #tpu.pipeline_mode<synchronous>, transform_indices = @transform_2, window_bounds = array<i64: 8, 1>}, {pipeline_mode = #tpu.pipeline_mode<synchronous>, transform_indices = @transform_3, window_bounds = array<i64: 8, 4>}, {pipeline_mode = #tpu.pipeline_mode<synchronous>, transform_indices = @transform_4, window_bounds = array<i64: 8, 1>}, {transform_indices = @transform_5, window_bounds = array<i64: 16, 256>}]} {
    %c0 = arith.constant 0 : index
    %c0_0 = arith.constant 0 : index
    %0 = vector.load %arg1[%c0, %c0_0] : memref<8x256xf32, #tpu.memory_space<vmem>>, vector<8x256xf32>
    %c0_1 = arith.constant 0 : index
    %c0_2 = arith.constant 0 : index
    %1 = vector.load %arg2[%c0_1, %c0_2] : memref<8x9xf32, #tpu.memory_space<vmem>>, vector<8x9xf32>
    %c0_3 = arith.constant 0 : index
    %c0_4 = arith.constant 0 : index
    %2 = vector.load %arg3[%c0_3, %c0_4] : memref<8x1xf32, #tpu.memory_space<vmem>>, vector<8x1xf32>
    %c0_5 = arith.constant 0 : index
    %c0_6 = arith.constant 0 : index
    %3 = vector.load %arg4[%c0_5, %c0_6] : memref<8x4xf32, #tpu.memory_space<vmem>>, vector<8x4xf32>
    %c0_7 = arith.constant 0 : index
    %c0_8 = arith.constant 0 : index
    %4 = vector.load %arg5[%c0_7, %c0_8] : memref<8x1xf32, #tpu.memory_space<vmem>>, vector<8x1xf32>
    %5 = tpu.iota {dimensions = array<i32: 1>} : vector<1x256xi32>
    %c15_i32 = arith.constant 15 : i32
    %6 = vector.broadcast %c15_i32 : i32 to vector<1x256xi32>
    %7 = arith.andi %5, %6 : vector<1x256xi32>
    %c16_i32 = arith.constant 16 : i32
    %8 = vector.broadcast %c16_i32 : i32 to vector<1x256xi32>
    %9 = arith.cmpi sge, %5, %8 : vector<1x256xi32>
    %c240_i32 = arith.constant 240 : i32
    %10 = vector.broadcast %c240_i32 : i32 to vector<1x256xi32>
    %11 = arith.cmpi slt, %5, %10 : vector<1x256xi32>
    %c1_i32 = arith.constant 1 : i32
    %12 = vector.broadcast %c1_i32 : i32 to vector<1x256xi32>
    %13 = arith.cmpi sge, %7, %12 : vector<1x256xi32>
    %c15_i32_9 = arith.constant 15 : i32
    %14 = vector.broadcast %c15_i32_9 : i32 to vector<1x256xi32>
    %15 = arith.cmpi slt, %7, %14 : vector<1x256xi32>
    %c1_i32_10 = arith.constant 1 : i32
    %16 = tpu.dynamic_rotate %0 by %c1_i32_10 dim 1 : vector<8x256xf32>, i32 -> vector<8x256xf32>
    %cst = arith.constant 0.000000e+00 : f32
    %17 = vector.shape_cast %13 : vector<1x256xi1> to vector<1x256xi1>
    %18 = vector.broadcast %17 : vector<1x256xi1> to vector<8x256xi1>
    %19 = vector.broadcast %cst : f32 to vector<8x256xf32>
    %20 = arith.select %18, %16, %19 : vector<8x256xi1>, vector<8x256xf32>
    %c255_i32 = arith.constant 255 : i32
    %21 = tpu.dynamic_rotate %0 by %c255_i32 dim 1 : vector<8x256xf32>, i32 -> vector<8x256xf32>
    %cst_11 = arith.constant 0.000000e+00 : f32
    %22 = vector.shape_cast %15 : vector<1x256xi1> to vector<1x256xi1>
    %23 = vector.broadcast %22 : vector<1x256xi1> to vector<8x256xi1>
    %24 = vector.broadcast %cst_11 : f32 to vector<8x256xf32>
    %25 = arith.select %23, %21, %24 : vector<8x256xi1>, vector<8x256xf32>
    %26 = vector.extract_strided_slice %1 {offsets = [0, 3], sizes = [8, 1], strides = [1, 1]} : vector<8x9xf32> to vector<8x1xf32>
    %27 = vector.broadcast %26 : vector<8x1xf32> to vector<8x256xf32>
    %28 = arith.mulf %27, %20 : vector<8x256xf32>
    %29 = vector.extract_strided_slice %1 {offsets = [0, 4], sizes = [8, 1], strides = [1, 1]} : vector<8x9xf32> to vector<8x1xf32>
    %30 = vector.broadcast %29 : vector<8x1xf32> to vector<8x256xf32>
    %31 = arith.mulf %30, %0 : vector<8x256xf32>
    %32 = arith.addf %28, %31 : vector<8x256xf32>
    %33 = vector.extract_strided_slice %1 {offsets = [0, 5], sizes = [8, 1], strides = [1, 1]} : vector<8x9xf32> to vector<8x1xf32>
    %34 = vector.broadcast %33 : vector<8x1xf32> to vector<8x256xf32>
    %35 = arith.mulf %34, %25 : vector<8x256xf32>
    %36 = arith.addf %32, %35 : vector<8x256xf32>
    %37 = vector.broadcast %2 : vector<8x1xf32> to vector<8x256xf32>
    %38 = arith.addf %37, %36 : vector<8x256xf32>
    %39 = vector.extract_strided_slice %1 {offsets = [0, 0], sizes = [8, 1], strides = [1, 1]} : vector<8x9xf32> to vector<8x1xf32>
    %40 = vector.broadcast %39 : vector<8x1xf32> to vector<8x256xf32>
    %41 = arith.mulf %40, %20 : vector<8x256xf32>
    %42 = vector.extract_strided_slice %1 {offsets = [0, 1], sizes = [8, 1], strides = [1, 1]} : vector<8x9xf32> to vector<8x1xf32>
    %43 = vector.broadcast %42 : vector<8x1xf32> to vector<8x256xf32>
    %44 = arith.mulf %43, %0 : vector<8x256xf32>
    %45 = arith.addf %41, %44 : vector<8x256xf32>
    %46 = vector.extract_strided_slice %1 {offsets = [0, 2], sizes = [8, 1], strides = [1, 1]} : vector<8x9xf32> to vector<8x1xf32>
    %47 = vector.broadcast %46 : vector<8x1xf32> to vector<8x256xf32>
    %48 = arith.mulf %47, %25 : vector<8x256xf32>
    %49 = arith.addf %45, %48 : vector<8x256xf32>
    %c16_i32_12 = arith.constant 16 : i32
    %50 = tpu.dynamic_rotate %49 by %c16_i32_12 dim 1 : vector<8x256xf32>, i32 -> vector<8x256xf32>
    %cst_13 = arith.constant 0.000000e+00 : f32
    %51 = vector.shape_cast %9 : vector<1x256xi1> to vector<1x256xi1>
    %52 = vector.broadcast %51 : vector<1x256xi1> to vector<8x256xi1>
    %53 = vector.broadcast %cst_13 : f32 to vector<8x256xf32>
    %54 = arith.select %52, %50, %53 : vector<8x256xi1>, vector<8x256xf32>
    %55 = arith.addf %38, %54 : vector<8x256xf32>
    %56 = vector.extract_strided_slice %1 {offsets = [0, 6], sizes = [8, 1], strides = [1, 1]} : vector<8x9xf32> to vector<8x1xf32>
    %57 = vector.broadcast %56 : vector<8x1xf32> to vector<8x256xf32>
    %58 = arith.mulf %57, %20 : vector<8x256xf32>
    %59 = vector.extract_strided_slice %1 {offsets = [0, 7], sizes = [8, 1], strides = [1, 1]} : vector<8x9xf32> to vector<8x1xf32>
    %60 = vector.broadcast %59 : vector<8x1xf32> to vector<8x256xf32>
    %61 = arith.mulf %60, %0 : vector<8x256xf32>
    %62 = arith.addf %58, %61 : vector<8x256xf32>
    %63 = vector.extract_strided_slice %1 {offsets = [0, 8], sizes = [8, 1], strides = [1, 1]} : vector<8x9xf32> to vector<8x1xf32>
    %64 = vector.broadcast %63 : vector<8x1xf32> to vector<8x256xf32>
    %65 = arith.mulf %64, %25 : vector<8x256xf32>
    %66 = arith.addf %62, %65 : vector<8x256xf32>
    %c240_i32_14 = arith.constant 240 : i32
    %67 = tpu.dynamic_rotate %66 by %c240_i32_14 dim 1 : vector<8x256xf32>, i32 -> vector<8x256xf32>
    %cst_15 = arith.constant 0.000000e+00 : f32
    %68 = vector.shape_cast %11 : vector<1x256xi1> to vector<1x256xi1>
    %69 = vector.broadcast %68 : vector<1x256xi1> to vector<8x256xi1>
    %70 = vector.broadcast %cst_15 : f32 to vector<8x256xf32>
    %71 = arith.select %69, %67, %70 : vector<8x256xi1>, vector<8x256xf32>
    %72 = arith.addf %55, %71 : vector<8x256xf32>
    %73 = vector.shape_cast %4 : vector<8x1xf32> to vector<8x1xf32>
    %74 = vector.broadcast %73 : vector<8x1xf32> to vector<8x256xf32>
    %75 = vector.extract_strided_slice %3 {offsets = [0, 0], sizes = [8, 1], strides = [1, 1]} : vector<8x4xf32> to vector<8x1xf32>
    %76 = vector.extract_strided_slice %72 {offsets = [0, 0], sizes = [1, 256], strides = [1, 1]} : vector<8x256xf32> to vector<1x256xf32>
    %77 = vector.broadcast %75 : vector<8x1xf32> to vector<8x256xf32>
    %78 = vector.broadcast %76 : vector<1x256xf32> to vector<8x256xf32>
    %79 = arith.mulf %77, %78 : vector<8x256xf32>
    %80 = arith.addf %74, %79 : vector<8x256xf32>
    %81 = vector.extract_strided_slice %3 {offsets = [0, 1], sizes = [8, 1], strides = [1, 1]} : vector<8x4xf32> to vector<8x1xf32>
    %82 = vector.extract_strided_slice %72 {offsets = [1, 0], sizes = [1, 256], strides = [1, 1]} : vector<8x256xf32> to vector<1x256xf32>
    %83 = vector.broadcast %81 : vector<8x1xf32> to vector<8x256xf32>
    %84 = vector.broadcast %82 : vector<1x256xf32> to vector<8x256xf32>
    %85 = arith.mulf %83, %84 : vector<8x256xf32>
    %86 = arith.addf %80, %85 : vector<8x256xf32>
    %87 = vector.extract_strided_slice %3 {offsets = [0, 2], sizes = [8, 1], strides = [1, 1]} : vector<8x4xf32> to vector<8x1xf32>
    %88 = vector.extract_strided_slice %72 {offsets = [2, 0], sizes = [1, 256], strides = [1, 1]} : vector<8x256xf32> to vector<1x256xf32>
    %89 = vector.broadcast %87 : vector<8x1xf32> to vector<8x256xf32>
    %90 = vector.broadcast %88 : vector<1x256xf32> to vector<8x256xf32>
    %91 = arith.mulf %89, %90 : vector<8x256xf32>
    %92 = arith.addf %86, %91 : vector<8x256xf32>
    %93 = vector.extract_strided_slice %3 {offsets = [0, 3], sizes = [8, 1], strides = [1, 1]} : vector<8x4xf32> to vector<8x1xf32>
    %94 = vector.extract_strided_slice %72 {offsets = [3, 0], sizes = [1, 256], strides = [1, 1]} : vector<8x256xf32> to vector<1x256xf32>
    %95 = vector.broadcast %93 : vector<8x1xf32> to vector<8x256xf32>
    %96 = vector.broadcast %94 : vector<1x256xf32> to vector<8x256xf32>
    %97 = arith.mulf %95, %96 : vector<8x256xf32>
    %98 = arith.addf %92, %97 : vector<8x256xf32>
    %cst_16 = arith.constant dense<0.000000e+00> : vector<8xf32>
    %99 = vector.multi_reduction <add>, %98, %cst_16 [1] : vector<8x256xf32> to vector<8xf32>
    %100 = vector.shape_cast %99 : vector<8xf32> to vector<8x1xf32>
    %cst_17 = arith.constant 3.906250e-03 : f32
    %101 = vector.broadcast %cst_17 : f32 to vector<8x1xf32>
    %102 = arith.mulf %100, %101 : vector<8x1xf32>
    %103 = vector.broadcast %102 : vector<8x1xf32> to vector<8x256xf32>
    %104 = arith.subf %98, %103 : vector<8x256xf32>
    %105 = arith.mulf %104, %104 : vector<8x256xf32>
    %cst_18 = arith.constant dense<0.000000e+00> : vector<8xf32>
    %106 = vector.multi_reduction <add>, %105, %cst_18 [1] : vector<8x256xf32> to vector<8xf32>
    %107 = vector.shape_cast %106 : vector<8xf32> to vector<8x1xf32>
    %cst_19 = arith.constant 3.906250e-03 : f32
    %108 = vector.broadcast %cst_19 : f32 to vector<8x1xf32>
    %109 = arith.mulf %107, %108 : vector<8x1xf32>
    %cst_20 = arith.constant 9.99999974E-6 : f32
    %110 = vector.broadcast %cst_20 : f32 to vector<8x1xf32>
    %111 = arith.addf %109, %110 : vector<8x1xf32>
    %112 = math.rsqrt %111 : vector<8x1xf32>
    %113 = vector.broadcast %112 : vector<8x1xf32> to vector<8x256xf32>
    %114 = arith.mulf %104, %113 : vector<8x256xf32>
    %cst_21 = arith.constant 2.000000e-01 : f32
    %115 = vector.broadcast %cst_21 : f32 to vector<8x256xf32>
    %116 = arith.mulf %115, %114 : vector<8x256xf32>
    %117 = arith.maximumf %114, %116 : vector<8x256xf32>
    %c0_22 = arith.constant 0 : index
    %c0_23 = arith.constant 0 : index
    %118 = vector.load %arg6[%c0_22, %c0_23] : memref<16x256xf32, #tpu.memory_space<vmem>>, vector<8x256xf32>
    tpu.vector_store %arg6[%c0_22, %c0_23], %117 {strides = array<i32>} : memref<16x256xf32, #tpu.memory_space<vmem>>, vector<8x256xf32>,
    %119 = vector.extract_strided_slice %3 {offsets = [0, 0], sizes = [8, 1], strides = [1, 1]} : vector<8x4xf32> to vector<8x1xf32>
    %120 = vector.extract_strided_slice %72 {offsets = [4, 0], sizes = [1, 256], strides = [1, 1]} : vector<8x256xf32> to vector<1x256xf32>
    %121 = vector.broadcast %119 : vector<8x1xf32> to vector<8x256xf32>
    %122 = vector.broadcast %120 : vector<1x256xf32> to vector<8x256xf32>
    %123 = arith.mulf %121, %122 : vector<8x256xf32>
    %124 = arith.addf %74, %123 : vector<8x256xf32>
    %125 = vector.extract_strided_slice %3 {offsets = [0, 1], sizes = [8, 1], strides = [1, 1]} : vector<8x4xf32> to vector<8x1xf32>
    %126 = vector.extract_strided_slice %72 {offsets = [5, 0], sizes = [1, 256], strides = [1, 1]} : vector<8x256xf32> to vector<1x256xf32>
    %127 = vector.broadcast %125 : vector<8x1xf32> to vector<8x256xf32>
    %128 = vector.broadcast %126 : vector<1x256xf32> to vector<8x256xf32>
    %129 = arith.mulf %127, %128 : vector<8x256xf32>
    %130 = arith.addf %124, %129 : vector<8x256xf32>
    %131 = vector.extract_strided_slice %3 {offsets = [0, 2], sizes = [8, 1], strides = [1, 1]} : vector<8x4xf32> to vector<8x1xf32>
    %132 = vector.extract_strided_slice %72 {offsets = [6, 0], sizes = [1, 256], strides = [1, 1]} : vector<8x256xf32> to vector<1x256xf32>
    %133 = vector.broadcast %131 : vector<8x1xf32> to vector<8x256xf32>
    %134 = vector.broadcast %132 : vector<1x256xf32> to vector<8x256xf32>
    %135 = arith.mulf %133, %134 : vector<8x256xf32>
    %136 = arith.addf %130, %135 : vector<8x256xf32>
    %137 = vector.extract_strided_slice %3 {offsets = [0, 3], sizes = [8, 1], strides = [1, 1]} : vector<8x4xf32> to vector<8x1xf32>
    %138 = vector.extract_strided_slice %72 {offsets = [7, 0], sizes = [1, 256], strides = [1, 1]} : vector<8x256xf32> to vector<1x256xf32>
    %139 = vector.broadcast %137 : vector<8x1xf32> to vector<8x256xf32>
    %140 = vector.broadcast %138 : vector<1x256xf32> to vector<8x256xf32>
    %141 = arith.mulf %139, %140 : vector<8x256xf32>
    %142 = arith.addf %136, %141 : vector<8x256xf32>
    %cst_24 = arith.constant dense<0.000000e+00> : vector<8xf32>
    %143 = vector.multi_reduction <add>, %142, %cst_24 [1] : vector<8x256xf32> to vector<8xf32>
    %144 = vector.shape_cast %143 : vector<8xf32> to vector<8x1xf32>
    %cst_25 = arith.constant 3.906250e-03 : f32
    %145 = vector.broadcast %cst_25 : f32 to vector<8x1xf32>
    %146 = arith.mulf %144, %145 : vector<8x1xf32>
    %147 = vector.broadcast %146 : vector<8x1xf32> to vector<8x256xf32>
    %148 = arith.subf %142, %147 : vector<8x256xf32>
    %149 = arith.mulf %148, %148 : vector<8x256xf32>
    %cst_26 = arith.constant dense<0.000000e+00> : vector<8xf32>
    %150 = vector.multi_reduction <add>, %149, %cst_26 [1] : vector<8x256xf32> to vector<8xf32>
    %151 = vector.shape_cast %150 : vector<8xf32> to vector<8x1xf32>
    %cst_27 = arith.constant 3.906250e-03 : f32
    %152 = vector.broadcast %cst_27 : f32 to vector<8x1xf32>
    %153 = arith.mulf %151, %152 : vector<8x1xf32>
    %cst_28 = arith.constant 9.99999974E-6 : f32
    %154 = vector.broadcast %cst_28 : f32 to vector<8x1xf32>
    %155 = arith.addf %153, %154 : vector<8x1xf32>
    %156 = math.rsqrt %155 : vector<8x1xf32>
    %157 = vector.broadcast %156 : vector<8x1xf32> to vector<8x256xf32>
    %158 = arith.mulf %148, %157 : vector<8x256xf32>
    %cst_29 = arith.constant 2.000000e-01 : f32
    %159 = vector.broadcast %cst_29 : f32 to vector<8x256xf32>
    %160 = arith.mulf %159, %158 : vector<8x256xf32>
    %161 = arith.maximumf %158, %160 : vector<8x256xf32>
    %c8 = arith.constant 8 : index
    %c0_30 = arith.constant 0 : index
    %162 = vector.load %arg6[%c8, %c0_30] : memref<16x256xf32, #tpu.memory_space<vmem>>, vector<8x256xf32>
    tpu.vector_store %arg6[%c8, %c0_30], %161 {strides = array<i32>} : memref<16x256xf32, #tpu.memory_space<vmem>>, vector<8x256xf32>,
    return
  }
  func.func @transform_0(%arg0: i32) -> (i32, i32) {
    %c0_i32 = arith.constant 0 : i32
    %c0_i32_0 = arith.constant 0 : i32
    return %arg0, %c0_i32 : i32, i32
  }
  func.func @transform_1(%arg0: i32) -> (i32, i32) {
    %c0_i32 = arith.constant 0 : i32
    %c0_i32_0 = arith.constant 0 : i32
    %c0_i32_1 = arith.constant 0 : i32
    return %c0_i32, %c0_i32_0 : i32, i32
  }
  func.func @transform_2(%arg0: i32) -> (i32, i32) {
    %c0_i32 = arith.constant 0 : i32
    %c0_i32_0 = arith.constant 0 : i32
    %c0_i32_1 = arith.constant 0 : i32
    return %c0_i32, %c0_i32_0 : i32, i32
  }
  func.func @transform_3(%arg0: i32) -> (i32, i32) {
    %c0_i32 = arith.constant 0 : i32
    %c0_i32_0 = arith.constant 0 : i32
    %c0_i32_1 = arith.constant 0 : i32
    return %c0_i32, %c0_i32_0 : i32, i32
  }
  func.func @transform_4(%arg0: i32) -> (i32, i32) {
    %c0_i32 = arith.constant 0 : i32
    %c0_i32_0 = arith.constant 0 : i32
    %c0_i32_1 = arith.constant 0 : i32
    return %c0_i32, %c0_i32_0 : i32, i32
  }
  func.func @transform_5(%arg0: i32) -> (i32, i32) {
    %c0_i32 = arith.constant 0 : i32
    %c0_i32_0 = arith.constant 0 : i32
    return %arg0, %c0_i32 : i32, i32
  }
}

</mosaic_0001>

<llo_original>
// kernel: tpu_custom_call.1
$region0: #{tpu_custom_call.1}
  #allocation0 [shape = 'u32[]', space=smem, size = 0x4, offset = 0x4, fixed_abs, tag = 'smem constant byte address 0x4 - core index']
  #allocation1 [shape = 'u32[144,128]{1,0:T(1,128)}', space=vmem, size = 0x12000, scoped, tag = 'internal scratch']
  %s0 = inlined_call_operand.vmem [shape: f32[8,256], index: 0, kind: input, shape index: {}]
  %s1 = inlined_call_operand.vmem [shape: f32[8,9], index: 1, kind: input, shape index: {}]
  %s2 = inlined_call_operand.vmem [shape: f32[8,1], index: 2, kind: input, shape index: {}]
  %s3 = inlined_call_operand.vmem [shape: f32[8,4], index: 3, kind: input, shape index: {}]
  %s4 = inlined_call_operand.vmem [shape: f32[8,1], index: 4, kind: input, shape index: {}]
  %s5 = inlined_call_operand.hbm [shape: f32[16,256], index: 5, kind: output, shape index: {}]
  %s6 = sld [smem:[#allocation0]]
  $region30: #{tpu_custom_call.1} parent=0
    _
  %s8 = ssub.s32 1, %s6
  %s9 = scalar_select 0, %s8, %s6
  $region1: #{tpu_custom_call.1} parent=0
    #allocation2 [shape = 'u8[16384]{0}', space=vmem, size = 0x4000, scoped, tag = 'output window, operand 0, single buffered']
    #allocation3 [shape = 's32[1]{0}', space=sflag, size = 0x4, scoped, tag = 'scoped memory for tpu_custom_call.1']
    %10 = vsyncpa [#allocation3], 0
    // Predicated region
    $region2: #{tpu_custom_call.1} parent=1 // pred_check
      _
    $region3: #{tpu_custom_call.1} parent=1 // pred_check_branch
      %12 = sbr.rel (0) target = $region5
    $region4: #{tpu_custom_call.1} parent=1 // pred_region
      _
    $region5: #{tpu_custom_call.1} parent=1 // pred_fallthru
      _
    // Predicated region
    $region6: #{tpu_custom_call.1} parent=1 // pred_check
      _
    $region7: #{tpu_custom_call.1} parent=1 // pred_check_branch
      %14 = sbr.rel (0) target = $region9
    $region8: #{tpu_custom_call.1} parent=1 // pred_region
      _
    $region9: #{tpu_custom_call.1} parent=1 // pred_fallthru
      _
    // Predicated region
    $region10: #{tpu_custom_call.1} parent=1 // pred_check
      _
    $region11: #{tpu_custom_call.1} parent=1 // pred_check_branch
      %16 = sbr.rel (0) target = $region13
    $region12: #{tpu_custom_call.1} parent=1 // pred_region
      _
    $region13: #{tpu_custom_call.1} parent=1 // pred_fallthru
      _
    // Predicated region
    $region14: #{tpu_custom_call.1} parent=1 // pred_check
      _
    $region15: #{tpu_custom_call.1} parent=1 // pred_check_branch
      %18 = sbr.rel (0) target = $region17
    $region16: #{tpu_custom_call.1} parent=1 // pred_region
      _
    $region17: #{tpu_custom_call.1} parent=1 // pred_fallthru
      _
    // Predicated region
    $region18: #{tpu_custom_call.1} parent=1 // pred_check
      _
    $region19: #{tpu_custom_call.1} parent=1 // pred_check_branch
      %20 = sbr.rel (0) target = $region21
    $region20: #{tpu_custom_call.1} parent=1 // pred_region
      _
    $region21: #{tpu_custom_call.1} parent=1 // pred_fallthru
      _
    %v21 = vld [vmem:[%s0] sm:$0xff]
    %v22 = vld [vmem:[%s0 + $0x8] sm:$0xff]
    %v23 = vld [vmem:[%s1] sm:$0xff]
    %v24 = vld [vmem:[%s2] sm:$0xff]
    %v25 = vld [vmem:[%s3] sm:$0xff]
    %v26 = vld [vmem:[%s4] sm:$0xff]
    %v27 = vlaneseq
    %v28 = vand.u32 %v27, 127
    %v29 = vadd.s32 %v28, 128
    %v30 = vand.u32 %v28, 15
    %v31 = vand.u32 %v29, 15
    %vm32 = vcmp.ge.s32.totalorder %v28, 16
    %vm33 = vcmp.ge.s32.totalorder %v29, 16
    %vm34 = vcmp.lt.s32.totalorder %v28, 240
    %vm35 = vcmp.lt.s32.totalorder %v29, 240
    %vm36 = vcmp.ge.s32.totalorder %v30, 1
    %vm37 = vcmp.ge.s32.totalorder %v31, 1
    %vm38 = vcmp.lt.s32.totalorder %v30, 15
    %vm39 = vcmp.lt.s32.totalorder %v31, 15
    %40 = vrot.lane.b32.xlu0 %v21, 1
    %v41 = vpop.permute.xlu0 %40
    %42 = vrot.lane.b32.xlu0 %v22, 1
    %v43 = vpop.permute.xlu0 %42
    %vm44 = vcmp.lt.s32.totalorder %v28, 1
    %v45 = vsel %vm44, %v41, %v43
    %v46 = vsel %vm44, %v43, %v41
    %v47 = vsel %vm36, 1, 0
    %v48 = vsel %vm37, 1, 0
    %vm49 = vcmp.eq.s32.totalorder %v47, 1
    %vm50 = vcmp.eq.s32.totalorder %v48, 1
    %v51 = vsel %vm49, %v46, 0.0
    %v52 = vsel %vm50, %v45, 0.0
    %53 = vrot.lane.b32.xlu0 %v21, 127
    %v54 = vpop.permute.xlu0 %53
    %55 = vrot.lane.b32.xlu0 %v22, 127
    %v56 = vpop.permute.xlu0 %55
    %vm57 = vcmp.lt.s32.totalorder %v28, 127
    %v58 = vsel %vm57, %v54, %v56
    %v59 = vsel %vm57, %v56, %v54
    %v60 = vsel %vm38, 1, 0
    %v61 = vsel %vm39, 1, 0
    %vm62 = vcmp.eq.s32.totalorder %v60, 1
    %vm63 = vcmp.eq.s32.totalorder %v61, 1
    %v64 = vsel %vm62, %v58, 0.0
    %v65 = vsel %vm63, %v59, 0.0
    %67 = vset.pattern.permute.xlu0 3
    %68 = vperm.xlu0 %67, %v23
    %v69 = vpop.permute.xlu0 %68
    %v71 = vmul.f32 %v69, %v51
    %v72 = vmul.f32 %v69, %v52
    %73 = vset.pattern.permute.xlu0 4
    %74 = vperm.xlu0 %73, %v23
    %v75 = vpop.permute.xlu0 %74
    %v77 = vmul.f32 %v75, %v21
    %v78 = vmul.f32 %v75, %v22
    %v79 = vadd.f32 %v71, %v77
    %v80 = vadd.f32 %v72, %v78
    %81 = vset.pattern.permute.xlu0 5
    %82 = vperm.xlu0 %81, %v23
    %v83 = vpop.permute.xlu0 %82
    %v85 = vmul.f32 %v83, %v64
    %v86 = vmul.f32 %v83, %v65
    %v87 = vadd.f32 %v79, %v85
    %v88 = vadd.f32 %v80, %v86
    %90 = vset.pattern.permute.xlu0 0
    %91 = vperm.xlu0 %90, %v24
    %v92 = vpop.permute.xlu0 %91
    %v94 = vadd.f32 %v92, %v87
    %v95 = vadd.f32 %v92, %v88
    %96 = vset.pattern.permute.xlu0 0
    %97 = vperm.xlu0 %96, %v23
    %v98 = vpop.permute.xlu0 %97
    %v100 = vmul.f32 %v98, %v51
    %v101 = vmul.f32 %v98, %v52
    %102 = vset.pattern.permute.xlu0 1
    %103 = vperm.xlu0 %102, %v23
    %v104 = vpop.permute.xlu0 %103
    %v106 = vmul.f32 %v104, %v21
    %v107 = vmul.f32 %v104, %v22
    %v108 = vadd.f32 %v100, %v106
    %v109 = vadd.f32 %v101, %v107
    %110 = vset.pattern.permute.xlu0 2
    %111 = vperm.xlu0 %110, %v23
    %v112 = vpop.permute.xlu0 %111
    %v114 = vmul.f32 %v112, %v64
    %v115 = vmul.f32 %v112, %v65
    %v116 = vadd.f32 %v108, %v114
    %v117 = vadd.f32 %v109, %v115
    %118 = vrot.lane.b32.xlu0 %v116, 16
    %v119 = vpop.permute.xlu0 %118
    %120 = vrot.lane.b32.xlu0 %v117, 16
    %v121 = vpop.permute.xlu0 %120
    %vm122 = vcmp.lt.s32.totalorder %v28, 16
    %v123 = vsel %vm122, %v119, %v121
    %v124 = vsel %vm122, %v121, %v119
    %v125 = vsel %vm32, 1, 0
    %v126 = vsel %vm33, 1, 0
    %vm127 = vcmp.eq.s32.totalorder %v125, 1
    %vm128 = vcmp.eq.s32.totalorder %v126, 1
    %v129 = vsel %vm127, %v124, 0.0
    %v130 = vsel %vm128, %v123, 0.0
    %v131 = vadd.f32 %v94, %v129
    %v132 = vadd.f32 %v95, %v130
    %133 = vset.pattern.permute.xlu0 6
    %134 = vperm.xlu0 %133, %v23
    %v135 = vpop.permute.xlu0 %134
    %v137 = vmul.f32 %v135, %v51
    %v138 = vmul.f32 %v135, %v52
    %139 = vset.pattern.permute.xlu0 7
    %140 = vperm.xlu0 %139, %v23
    %v141 = vpop.permute.xlu0 %140
    %v143 = vmul.f32 %v141, %v21
    %v144 = vmul.f32 %v141, %v22
    %v145 = vadd.f32 %v137, %v143
    %v146 = vadd.f32 %v138, %v144
    %147 = vset.pattern.permute.xlu0 8
    %148 = vperm.xlu0 %147, %v23
    %v149 = vpop.permute.xlu0 %148
    %v151 = vmul.f32 %v149, %v64
    %v152 = vmul.f32 %v149, %v65
    %v153 = vadd.f32 %v145, %v151
    %v154 = vadd.f32 %v146, %v152
    %155 = vrot.lane.b32.xlu0 %v153, 112
    %v156 = vpop.permute.xlu0 %155
    %157 = vrot.lane.b32.xlu0 %v154, 112
    %v158 = vpop.permute.xlu0 %157
    %vm159 = vcmp.lt.s32.totalorder %v28, 112
    %v160 = vsel %vm159, %v156, %v158
    %v161 = vsel %vm159, %v158, %v156
    %v162 = vsel %vm34, 1, 0
    %v163 = vsel %vm35, 1, 0
    %vm164 = vcmp.eq.s32.totalorder %v162, 1
    %vm165 = vcmp.eq.s32.totalorder %v163, 1
    %v166 = vsel %vm164, %v160, 0.0
    %v167 = vsel %vm165, %v161, 0.0
    %v168 = vadd.f32 %v131, %v166
    %v169 = vadd.f32 %v132, %v167
    %171 = vset.pattern.permute.xlu0 0
    %172 = vperm.xlu0 %171, %v26
    %v173 = vpop.permute.xlu0 %172
    %176 = vset.pattern.permute.xlu0 0
    %177 = vperm.xlu0 %176, %v25
    %v178 = vpop.permute.xlu0 %177
    %v180 = vlaneseq
    %v181 = vshrl.u32 %v180, 7
    %v182 = vsub.s32 0, %v181
    %v183 = vrot.slane %v168, %v182
    %v184 = vlaneseq
    %v185 = vshrl.u32 %v184, 7
    %v186 = vsub.s32 0, %v185
    %v187 = vrot.slane %v169, %v186
    %v188 = vmul.f32 %v178, %v183
    %v189 = vmul.f32 %v178, %v187
    %v190 = vadd.f32 %v173, %v188
    %v191 = vadd.f32 %v173, %v189
    %192 = vset.pattern.permute.xlu0 1
    %193 = vperm.xlu0 %192, %v25
    %v194 = vpop.permute.xlu0 %193
    %v196 = vlaneseq
    %v197 = vshrl.u32 %v196, 7
    %v198 = vsub.s32 1, %v197
    %v199 = vrot.slane %v168, %v198
    %v200 = vlaneseq
    %v201 = vshrl.u32 %v200, 7
    %v202 = vsub.s32 1, %v201
    %v203 = vrot.slane %v169, %v202
    %v204 = vmul.f32 %v194, %v199
    %v205 = vmul.f32 %v194, %v203
    %v206 = vadd.f32 %v190, %v204
    %v207 = vadd.f32 %v191, %v205
    %208 = vset.pattern.permute.xlu0 2
    %209 = vperm.xlu0 %208, %v25
    %v210 = vpop.permute.xlu0 %209
    %v212 = vlaneseq
    %v213 = vshrl.u32 %v212, 7
    %v214 = vsub.s32 2, %v213
    %v215 = vrot.slane %v168, %v214
    %v216 = vlaneseq
    %v217 = vshrl.u32 %v216, 7
    %v218 = vsub.s32 2, %v217
    %v219 = vrot.slane %v169, %v218
    %v220 = vmul.f32 %v210, %v215
    %v221 = vmul.f32 %v210, %v219
    %v222 = vadd.f32 %v206, %v220
    %v223 = vadd.f32 %v207, %v221
    %224 = vset.pattern.permute.xlu0 3
    %225 = vperm.xlu0 %224, %v25
    %v226 = vpop.permute.xlu0 %225
    %v228 = vlaneseq
    %v229 = vshrl.u32 %v228, 7
    %v230 = vsub.s32 3, %v229
    %v231 = vrot.slane %v168, %v230
    %v232 = vlaneseq
    %v233 = vshrl.u32 %v232, 7
    %v234 = vsub.s32 3, %v233
    %v235 = vrot.slane %v169, %v234
    %v236 = vmul.f32 %v226, %v231
    %v237 = vmul.f32 %v226, %v235
    %v238 = vadd.f32 %v222, %v236
    %v239 = vadd.f32 %v223, %v237
    %v240 = vadd.f32 %v238, %v239
    %241 = vadd.xlane.f32.xlu0 %v240
    %v242 = vpop.xlane.xlu0 %241
    %v243 = vmul.f32 %v242, 0.00390625
    %v244 = vsub.f32 %v238, %v243
    %v245 = vsub.f32 %v239, %v243
    %v246 = vmul.f32 %v244, %v244
    %v247 = vmul.f32 %v245, %v245
    %v248 = vadd.f32 %v246, %v247
    %249 = vadd.xlane.f32.xlu0 %v248
    %v250 = vpop.xlane.xlu0 %249
    %v251 = vmul.f32 %v250, 0.00390625
    %v252 = vadd.f32 %v251, 1e-05
    %v253 = vrsqrt.pop %v252
    %v254 = vmul.f32 %v244, %v253
    %v255 = vmul.f32 %v245, %v253
    %v256 = vmul.f32 %v254, 0.2
    %v257 = vmul.f32 %v255, 0.2
    %v258 = vmax.f32 %v254, %v256
    %v259 = vmax.f32 %v255, %v257
    %260 = vst [vmem:[#allocation2] sm:$0xff] %v258
    %261 = vst [vmem:[#allocation2 + $0x8] sm:$0xff] %v259
    %v262 = vlaneseq
    %v263 = vshrl.u32 %v262, 7
    %v264 = vsub.s32 4, %v263
    %v265 = vrot.slane %v168, %v264
    %v266 = vlaneseq
    %v267 = vshrl.u32 %v266, 7
    %v268 = vsub.s32 4, %v267
    %v269 = vrot.slane %v169, %v268
    %v270 = vmul.f32 %v178, %v265
    %v271 = vmul.f32 %v178, %v269
    %v272 = vadd.f32 %v173, %v270
    %v273 = vadd.f32 %v173, %v271
    %v274 = vlaneseq
    %v275 = vshrl.u32 %v274, 7
    %v276 = vsub.s32 5, %v275
    %v277 = vrot.slane %v168, %v276
    %v278 = vlaneseq
    %v279 = vshrl.u32 %v278, 7
    %v280 = vsub.s32 5, %v279
    %v281 = vrot.slane %v169, %v280
    %v282 = vmul.f32 %v194, %v277
    %v283 = vmul.f32 %v194, %v281
    %v284 = vadd.f32 %v272, %v282
    %v285 = vadd.f32 %v273, %v283
    %v286 = vlaneseq
    %v287 = vshrl.u32 %v286, 7
    %v288 = vsub.s32 6, %v287
    %v289 = vrot.slane %v168, %v288
    %v290 = vlaneseq
    %v291 = vshrl.u32 %v290, 7
    %v292 = vsub.s32 6, %v291
    %v293 = vrot.slane %v169, %v292
    %v294 = vmul.f32 %v210, %v289
    %v295 = vmul.f32 %v210, %v293
    %v296 = vadd.f32 %v284, %v294
    %v297 = vadd.f32 %v285, %v295
    %v298 = vlaneseq
    %v299 = vshrl.u32 %v298, 7
    %v300 = vsub.s32 7, %v299
    %v301 = vrot.slane %v168, %v300
    %v302 = vlaneseq
    %v303 = vshrl.u32 %v302, 7
    %v304 = vsub.s32 7, %v303
    %v305 = vrot.slane %v169, %v304
    %v306 = vmul.f32 %v226, %v301
    %v307 = vmul.f32 %v226, %v305
    %v308 = vadd.f32 %v296, %v306
    %v309 = vadd.f32 %v297, %v307
    %v310 = vadd.f32 %v308, %v309
    %311 = vadd.xlane.f32.xlu0 %v310
    %v312 = vpop.xlane.xlu0 %311
    %v313 = vmul.f32 %v312, 0.00390625
    %v314 = vsub.f32 %v308, %v313
    %v315 = vsub.f32 %v309, %v313
    %v316 = vmul.f32 %v314, %v314
    %v317 = vmul.f32 %v315, %v315
    %v318 = vadd.f32 %v316, %v317
    %319 = vadd.xlane.f32.xlu0 %v318
    %v320 = vpop.xlane.xlu0 %319
    %v321 = vmul.f32 %v320, 0.00390625
    %v322 = vadd.f32 %v321, 1e-05
    %v323 = vrsqrt.pop %v322
    %v324 = vmul.f32 %v314, %v323
    %v325 = vmul.f32 %v315, %v323
    %v326 = vmul.f32 %v324, 0.2
    %v327 = vmul.f32 %v325, 0.2
    %v328 = vmax.f32 %v324, %v326
    %v329 = vmax.f32 %v325, %v327
    %330 = vst [vmem:[#allocation2 + $0x10] sm:$0xff] %v328
    %331 = vst [vmem:[#allocation2 + $0x18] sm:$0xff] %v329
    // Predicated region
    $region22: #{tpu_custom_call.1} parent=1 // pred_check
      _
    $region23: #{tpu_custom_call.1} parent=1 // pred_check_branch
      %333 = sbr.rel (0) target = $region25
    $region24: #{tpu_custom_call.1} parent=1 // pred_region
      %s335 = ssub.s32 512, 512
      %336 = vsyncadd [#allocation3], %s335
      %s337 = sshll.u32 [#allocation2], 4
      %s338 = int_to_ptr.vmem [resolvable:$true] %s337
      %343 = dma.vmem_to_hbm [thread:$0]  %s338, 512, %s5, [#allocation3], 256, 256, 16
    $region25: #{tpu_custom_call.1} parent=1 // pred_fallthru
      _
    // Predicated region
    $region26: #{tpu_custom_call.1} parent=1 // pred_check
      _
    $region27: #{tpu_custom_call.1} parent=1 // pred_check_branch
      %345 = sbr.rel (0) target = $region29
    $region28: #{tpu_custom_call.1} parent=1 // pred_region
      %346 = dma.done [#allocation3], 512
    $region29: #{tpu_custom_call.1} parent=1 // pred_fallthru
      _
    %347 = vsyncpa [#allocation3], 1

</llo_original>
